<compile_context>
chip_gen: v7x
topology: tpu7x:2x2x1
jax: 0.10.0
libtpu: 0.0.40
codegen_flags: <defaults>
</compile_context>

<pallas_src>
import jax
import jax.numpy as jnp
from jax import lax
from jax.experimental import pallas as pl
from jax.experimental.pallas import tpu as pltpu

_EPS = 1e-6
_MAX_TM = 256  # row-tile cap (MXU friendly, VMEM safe on v7x)


def _round_up(x, m):
    return ((x + m - 1) // m) * m


def _vmem_budget_bytes():
    """~75% of physical VMEM (fallback: conservative v7x 64 MiB)."""
    try:
        cap = int(pltpu.get_tpu_info().vmem_capacity_bytes)
    except Exception:
        cap = 64 * 1024 * 1024
    return (cap * 3) // 4


def _cmid_kernel(a_ref, b_ref, l1_ref, l2_ref, num_ref):
    j = pl.program_id(1)

    # Output block doubles as the accumulator (resident across the inner
    # column axis); initialize on the first column step.
    @pl.when(j == 0)
    def _init():
        num_ref[...] = jnp.zeros_like(num_ref)

    # MXU: (tm, D) x (tn, D)^T -> (tm, tn), f32 accumulation, native dtype in.
    dmat = lax.dot_general(
        a_ref[...], b_ref[...],
        dimension_numbers=(((1,), (1,)), ((), ())),
        preferred_element_type=jnp.float32,
    )

    l1 = l1_ref[...]          # (tm, 1) int32
    l2 = l2_ref[...]          # (1, tn) int32
    tn = dmat.shape[1]
    c0 = 2.0 + 2.0 * _EPS     # folded constants: (1 - d + eps)*2 == c0 - 2*d

    # Process the tile in 128-lane strips: short vreg live ranges, and the
    # accumulator chain per lane strip is a single VMEM read-modify-write.
    for c in range(tn // 128):
        cs = c * 128
        strip = dmat[:, cs:cs + 128]
        dist = jnp.sqrt(jnp.maximum(c0 - 2.0 * strip, 0.0))
        mask = l1 == l2[:, cs:cs + 128]          # (tm,1) == (1,128) -> (tm,128)
        num_ref[...] += jnp.where(mask, dist, 0.0)


def cross_modality_identity_loss(embeddings1, embeddings2, labels1, labels2):
    assert embeddings1.shape == embeddings2.shape and labels1.shape == labels2.shape, \
        'check the input for CrossModalityIdentityLoss'
    n, d = embeddings1.shape
    itemsize = jnp.dtype(embeddings1.dtype).itemsize
    budget = _vmem_budget_bytes()

    # Row tile: (8-aligned, <=256).  Split once if there would be only a
    # single row tile so the "parallel" axis can feed both v7x TensorCores.
    tm = min(_MAX_TM, _round_up(n, 8))
    if (_round_up(n, tm) // tm) < 2 and tm >= 16:
        tm = _round_up(tm // 2, 8)
    n_rows = _round_up(n, tm)

    # Column tile: widest of (512, 256, 128) whose double-buffered inputs fit
    # the VMEM budget (scales correctly for v7x's 64 MiB vs v5e/v6e 128 MiB).
    tn = 128
    for cand in (512, 256, 128):
        cand = min(cand, max(128, _round_up(n, 128)))
        est = (2 * (tm + cand) * d * itemsize        # double-buffered inputs
               + 4 * tm * 128 * 4                    # accumulator blocks
               + (4 << 20))                          # intermediates headroom
        if est <= budget:
            tn = cand
            break
    n_cols = _round_up(n, tn)
    grid = (n_rows // tm, n_cols // tn)
    num_row_tiles = grid[0]

    # Zero-pad embeddings to tile multiples.
    e1 = embeddings1 if n_rows == n else jnp.pad(embeddings1, ((0, n_rows - n), (0, 0)))
    e2 = embeddings2 if n_cols == n else jnp.pad(embeddings2, ((0, n_cols - n), (0, 0)))

    # Labels as int32; padded rows/cols get data-derived sentinels strictly
    # below every real label (and distinct from each other) so they never
    # enter the mask.  (Robust to arbitrary/negative integer labels; only a
    # label equal to INT32_MIN could underflow — pathological.)
    l1i = labels1.reshape(-1).astype(jnp.int32)
    l2i = labels2.reshape(-1).astype(jnp.int32)
    lo = jnp.minimum(jnp.min(l1i), jnp.min(l2i))
    l1p = l1i if n_rows == n else jnp.concatenate(
        [l1i, jnp.full((n_rows - n,), lo - 1, dtype=jnp.int32)])
    l2p = l2i if n_cols == n else jnp.concatenate(
        [l2i, jnp.full((n_cols - n,), lo - 2, dtype=jnp.int32)])
    l1p = l1p.reshape(n_rows, 1)
    l2p = l2p.reshape(1, n_cols)

    num_part = pl.pallas_call(
        _cmid_kernel,
        out_shape=jax.ShapeDtypeStruct((num_row_tiles * tm, 128), jnp.float32),
        grid=grid,
        in_specs=[
            # Row tile of e1 is resident across the whole inner column loop.
            pl.BlockSpec((tm, d), lambda i, j: (i, 0)),
            pl.BlockSpec((tn, d), lambda i, j: (j, 0)),
            pl.BlockSpec((tm, 1), lambda i, j: (i, 0)),
            pl.BlockSpec((1, tn), lambda i, j: (0, j)),
        ],
        out_specs=pl.BlockSpec((tm, 128), lambda i, j: (i, 0)),
        compiler_params=pltpu.CompilerParams(
            # Row tiles are independent partial sums -> shard across cores;
            # the column axis carries the accumulation.
            dimension_semantics=("parallel", "arbitrary"),
            vmem_limit_bytes=int(budget),
        ),
    )(e1, e2, l1p, l2p)

    num = jnp.sum(num_part)
    # Denominator needs no distances: computed from the labels alone in XLA.
    den = jnp.sum((l1i[:, None] == l2i[None, :]).astype(jnp.float32))
    return num / den


if __name__ == "__main__":
    key = jax.random.PRNGKey(0)
    k1, k2 = jax.random.split(key)

    bs, dim = 8, 32  # small (N, D) embeddings

    e1 = jax.random.normal(k1, (bs, dim), dtype=jnp.float32)
    e2 = jax.random.normal(k2, (bs, dim), dtype=jnp.float32)
    # the unit-l2 distance formula assumes unit-norm embeddings
    e1 = e1 / jnp.linalg.norm(e1, axis=1, keepdims=True)
    e2 = e2 / jnp.linalg.norm(e2, axis=1, keepdims=True)

    # deterministic labels with guaranteed cross-modality matches
    labels1 = jnp.arange(bs, dtype=jnp.int32) % 4
    labels2 = jnp.arange(bs, dtype=jnp.int32) % 4

    loss = cross_modality_identity_loss(e1, e2, labels1, labels2)
    loss = jax.block_until_ready(loss)

    # pure-JAX reference (mirrors the PyTorch module)
    dmat = jnp.sqrt((1.0 - e1 @ e2.T + _EPS) * 2.0)
    mask = (labels1[:, None] == labels2[None, :]).astype(jnp.float32)
    ref = jnp.sum(dmat * mask) / jnp.sum(mask)

    assert jnp.allclose(loss, ref, rtol=1e-5, atol=1e-5), (loss, ref)
    print("KERNEL_OK")
</pallas_src>

<mosaic_0001>
module attributes {stable_mosaic.version = 11 : i64} {
  func.func @_cmid_kernel(%arg0: i32, %arg1: i32, %arg2: memref<8x32xf32, #tpu.memory_space<vmem>>, %arg3: memref<128x32xf32, #tpu.memory_space<vmem>>, %arg4: memref<8x1xi32, #tpu.memory_space<vmem>>, %arg5: memref<1x128xi32, #tpu.memory_space<vmem>>, %arg6: memref<8x128xf32, #tpu.memory_space<vmem>>) attributes {dimension_semantics = [#tpu.dimension_semantics<parallel>, #tpu.dimension_semantics<arbitrary>], iteration_bounds = array<i64: 1, 1>, scalar_prefetch = 0 : i64, scratch_operands = 0 : i64, tpu.core_type = #tpu.core_type<tc>, window_params = [{transform_indices = @transform_0, window_bounds = array<i64: 8, 32>}, {transform_indices = @transform_1, window_bounds = array<i64: 128, 32>}, {transform_indices = @transform_2, window_bounds = array<i64: 8, 1>}, {transform_indices = @transform_3, window_bounds = array<i64: 1, 128>}, {transform_indices = @transform_4, window_bounds = array<i64: 8, 128>}]} {
    %c0_i32 = arith.constant 0 : i32
    %0 = arith.cmpi eq, %arg1, %c0_i32 : i32
    %1 = arith.extui %0 : i1 to i32
    %c0_i32_0 = arith.constant 0 : i32
    %2 = arith.cmpi ne, %1, %c0_i32_0 : i32
    scf.if %2 {
      %cst_16 = arith.constant 0.000000e+00 : f32
      %23 = vector.broadcast %cst_16 : f32 to vector<8x128xf32>
      %c0_17 = arith.constant 0 : index
      %c0_18 = arith.constant 0 : index
      %24 = vector.load %arg6[%c0_17, %c0_18] : memref<8x128xf32, #tpu.memory_space<vmem>>, vector<8x128xf32>
      tpu.vector_store %arg6[%c0_17, %c0_18], %23 {strides = array<i32>} : memref<8x128xf32, #tpu.memory_space<vmem>>, vector<8x128xf32>,
    } else {
    }
    %c0 = arith.constant 0 : index
    %c0_1 = arith.constant 0 : index
    %3 = vector.load %arg2[%c0, %c0_1] : memref<8x32xf32, #tpu.memory_space<vmem>>, vector<8x32xf32>
    %c0_2 = arith.constant 0 : index
    %c0_3 = arith.constant 0 : index
    %4 = vector.load %arg3[%c0_2, %c0_3] : memref<128x32xf32, #tpu.memory_space<vmem>>, vector<128x32xf32>
    %cst = arith.constant dense<0.000000e+00> : vector<8x128xf32>
    %5 = tpu.matmul %3, %4, %cst {dimension_numbers = #tpu.dot_dimension_numbers<[1], [1], [0], [0], [0, 0, 1, 0], [], []>} : vector<8x32xf32>, vector<128x32xf32>, vector<8x128xf32> -> vector<8x128xf32>
    %c0_4 = arith.constant 0 : index
    %c0_5 = arith.constant 0 : index
    %6 = vector.load %arg4[%c0_4, %c0_5] : memref<8x1xi32, #tpu.memory_space<vmem>>, vector<8x1xi32>
    %c0_6 = arith.constant 0 : index
    %c0_7 = arith.constant 0 : index
    %7 = vector.load %arg5[%c0_6, %c0_7] : memref<1x128xi32, #tpu.memory_space<vmem>>, vector<1x128xi32>
    %cst_8 = arith.constant 2.000000e+00 : f32
    %8 = vector.broadcast %cst_8 : f32 to vector<8x128xf32>
    %9 = arith.mulf %8, %5 : vector<8x128xf32>
    %cst_9 = arith.constant 2.00000191 : f32
    %10 = vector.broadcast %cst_9 : f32 to vector<8x128xf32>
    %11 = arith.subf %10, %9 : vector<8x128xf32>
    %cst_10 = arith.constant 0.000000e+00 : f32
    %12 = vector.broadcast %cst_10 : f32 to vector<8x128xf32>
    %13 = arith.maximumf %11, %12 : vector<8x128xf32>
    %14 = math.sqrt %13 : vector<8x128xf32>
    %15 = vector.broadcast %6 : vector<8x1xi32> to vector<8x128xi32>
    %16 = vector.broadcast %7 : vector<1x128xi32> to vector<8x128xi32>
    %17 = arith.cmpi eq, %15, %16 : vector<8x128xi32>
    %c0_11 = arith.constant 0 : index
    %c0_12 = arith.constant 0 : index
    %18 = vector.load %arg6[%c0_11, %c0_12] : memref<8x128xf32, #tpu.memory_space<vmem>>, vector<8x128xf32>
    %cst_13 = arith.constant 0.000000e+00 : f32
    %19 = vector.broadcast %cst_13 : f32 to vector<8x128xf32>
    %20 = arith.select %17, %14, %19 : vector<8x128xi1>, vector<8x128xf32>
    %21 = arith.addf %18, %20 : vector<8x128xf32>
    %c0_14 = arith.constant 0 : index
    %c0_15 = arith.constant 0 : index
    %22 = vector.load %arg6[%c0_14, %c0_15] : memref<8x128xf32, #tpu.memory_space<vmem>>, vector<8x128xf32>
    tpu.vector_store %arg6[%c0_14, %c0_15], %21 {strides = array<i32>} : memref<8x128xf32, #tpu.memory_space<vmem>>, vector<8x128xf32>,
    return
  }
  func.func @transform_0(%arg0: i32, %arg1: i32) -> (i32, i32) {
    %c0_i32 = arith.constant 0 : i32
    %c0_i32_0 = arith.constant 0 : i32
    return %arg0, %c0_i32 : i32, i32
  }
  func.func @transform_1(%arg0: i32, %arg1: i32) -> (i32, i32) {
    %c0_i32 = arith.constant 0 : i32
    %c0_i32_0 = arith.constant 0 : i32
    return %arg1, %c0_i32 : i32, i32
  }
  func.func @transform_2(%arg0: i32, %arg1: i32) -> (i32, i32) {
    %c0_i32 = arith.constant 0 : i32
    %c0_i32_0 = arith.constant 0 : i32
    return %arg0, %c0_i32 : i32, i32
  }
  func.func @transform_3(%arg0: i32, %arg1: i32) -> (i32, i32) {
    %c0_i32 = arith.constant 0 : i32
    %c0_i32_0 = arith.constant 0 : i32
    return %c0_i32, %arg1 : i32, i32
  }
  func.func @transform_4(%arg0: i32, %arg1: i32) -> (i32, i32) {
    %c0_i32 = arith.constant 0 : i32
    %c0_i32_0 = arith.constant 0 : i32
    return %arg0, %c0_i32 : i32, i32
  }
}

</mosaic_0001>

<llo_original>
// kernel: tpu_custom_call.1
$region0: #{tpu_custom_call.1}
  #allocation0 [shape = 'u32[]', space=smem, size = 0x4, offset = 0x4, fixed_abs, tag = 'smem constant byte address 0x4 - core index']
  #allocation1 [shape = 'u32[144,128]{1,0:T(1,128)}', space=vmem, size = 0x12000, scoped, tag = 'internal scratch']
  %s0 = inlined_call_operand.vmem [shape: f32[8,32], index: 0, kind: input, shape index: {}]
  %s1 = inlined_call_operand.vmem [shape: f32[128,32], index: 1, kind: input, shape index: {}]
  %s2 = inlined_call_operand.vmem [shape: s32[8,1], index: 2, kind: input, shape index: {}]
  %s3 = inlined_call_operand.vmem [shape: s32[1,128], index: 3, kind: input, shape index: {}]
  %s4 = inlined_call_operand.hbm [shape: f32[8,128], index: 4, kind: output, shape index: {}]
  %s5 = sld [smem:[#allocation0]]
  $region30: #{tpu_custom_call.1} parent=0
    _
  %s7 = ssub.s32 1, %s5
  %s8 = scalar_select 0, %s7, %s5
  $region1: #{tpu_custom_call.1} parent=0
    #allocation2 [shape = 'u8[4096]{0}', space=vmem, size = 0x1000, scoped, tag = 'output window, operand 0, single buffered']
    #allocation3 [shape = 's32[1]{0}', space=sflag, size = 0x4, scoped, tag = 'scoped memory for tpu_custom_call.1']
    %9 = vsyncpa [#allocation3], 0
    // Predicated region
    $region2: #{tpu_custom_call.1} parent=1 // pred_check
      _
    $region3: #{tpu_custom_call.1} parent=1 // pred_check_branch
      %11 = sbr.rel (0) target = $region5
    $region4: #{tpu_custom_call.1} parent=1 // pred_region
      _
    $region5: #{tpu_custom_call.1} parent=1 // pred_fallthru
      _
    // Predicated region
    $region6: #{tpu_custom_call.1} parent=1 // pred_check
      _
    $region7: #{tpu_custom_call.1} parent=1 // pred_check_branch
      %13 = sbr.rel (0) target = $region9
    $region8: #{tpu_custom_call.1} parent=1 // pred_region
      _
    $region9: #{tpu_custom_call.1} parent=1 // pred_fallthru
      _
    // Predicated region
    $region10: #{tpu_custom_call.1} parent=1 // pred_check
      _
    $region11: #{tpu_custom_call.1} parent=1 // pred_check_branch
      %15 = sbr.rel (0) target = $region13
    $region12: #{tpu_custom_call.1} parent=1 // pred_region
      _
    $region13: #{tpu_custom_call.1} parent=1 // pred_fallthru
      _
    // Predicated region
    $region14: #{tpu_custom_call.1} parent=1 // pred_check
      _
    $region15: #{tpu_custom_call.1} parent=1 // pred_check_branch
      %17 = sbr.rel (0) target = $region17
    $region16: #{tpu_custom_call.1} parent=1 // pred_region
      _
    $region17: #{tpu_custom_call.1} parent=1 // pred_fallthru
      _
    %p18 = scmp.eq.s32.totalorder 0, 0
    // Predicated region
    $region18: #{tpu_custom_call.1} parent=1 // pred_check
      %p19 = pneg %p18
    $region19: #{tpu_custom_call.1} parent=1 // pred_check_branch
      %21 = sbr.rel (%p19) target = $region21
    $region20: #{tpu_custom_call.1} parent=1 // pred_region
      %22 = vst [vmem:[#allocation2] sm:$0xff] 0.0
    $region21: #{tpu_custom_call.1} parent=1 // pred_fallthru
      _
    %v23 = vld [vmem:[%s0] sm:$0xff]
    %v24 = vld [vmem:[%s1] sm:$0xff]
    %v25 = vld [vmem:[%s1 + $0x8] sm:$0xff]
    %v26 = vld [vmem:[%s1 + $0x10] sm:$0xff]
    %v27 = vld [vmem:[%s1 + $0x18] sm:$0xff]
    %v28 = vld [vmem:[%s1 + $0x20] sm:$0xff]
    %v29 = vld [vmem:[%s1 + $0x28] sm:$0xff]
    %v30 = vld [vmem:[%s1 + $0x30] sm:$0xff]
    %v31 = vld [vmem:[%s1 + $0x38] sm:$0xff]
    %v32 = vld [vmem:[%s1 + $0x40] sm:$0xff]
    %v33 = vld [vmem:[%s1 + $0x48] sm:$0xff]
    %v34 = vld [vmem:[%s1 + $0x50] sm:$0xff]
    %v35 = vld [vmem:[%s1 + $0x58] sm:$0xff]
    %v36 = vld [vmem:[%s1 + $0x60] sm:$0xff]
    %v37 = vld [vmem:[%s1 + $0x68] sm:$0xff]
    %v38 = vld [vmem:[%s1 + $0x70] sm:$0xff]
    %v39 = vld [vmem:[%s1 + $0x78] sm:$0xff]
    %vm40 = vcmask 261120
    %v42 = vsel %vm40, %v23, 0
    %v45 = vsel %vm40, %v24, 0
    %v48 = vsel %vm40, %v25, 0
    %v51 = vsel %vm40, %v26, 0
    %v54 = vsel %vm40, %v27, 0
    %v57 = vsel %vm40, %v28, 0
    %v60 = vsel %vm40, %v29, 0
    %v63 = vsel %vm40, %v30, 0
    %v66 = vsel %vm40, %v31, 0
    %v69 = vsel %vm40, %v32, 0
    %v72 = vsel %vm40, %v33, 0
    %v75 = vsel %vm40, %v34, 0
    %v78 = vsel %vm40, %v35, 0
    %v81 = vsel %vm40, %v36, 0
    %v84 = vsel %vm40, %v37, 0
    %v87 = vsel %vm40, %v38, 0
    %v90 = vsel %vm40, %v39, 0
    %92 = vmatprep.subr.mxu0 0.0
    %93 = vmatpush1.xpose.msra.mxu0 %v45
    %94 = vmatprep.subr.mxu0 0.0
    %95 = vmatpush1.xpose.msra.mxu0 %v48
    %96 = vmatprep.subr.mxu0 0.0
    %97 = vmatpush1.xpose.msra.mxu0 %v51
    %98 = vmatprep.subr.mxu0 0.0
    %99 = vmatpush1.xpose.msra.mxu0 %v54
    %100 = vmatprep.subr.mxu0 0.0
    %101 = vmatpush1.xpose.msra.mxu0 %v57
    %102 = vmatprep.subr.mxu0 0.0
    %103 = vmatpush1.xpose.msra.mxu0 %v60
    %104 = vmatprep.subr.mxu0 0.0
    %105 = vmatpush1.xpose.msra.mxu0 %v63
    %106 = vmatprep.subr.mxu0 0.0
    %107 = vmatpush1.xpose.msra.mxu0 %v66
    %108 = vmatprep.subr.mxu0 0.0
    %109 = vmatpush1.xpose.msra.mxu0 %v69
    %110 = vmatprep.subr.mxu0 0.0
    %111 = vmatpush1.xpose.msra.mxu0 %v72
    %112 = vmatprep.subr.mxu0 0.0
    %113 = vmatpush1.xpose.msra.mxu0 %v75
    %114 = vmatprep.subr.mxu0 0.0
    %115 = vmatpush1.xpose.msra.mxu0 %v78
    %116 = vmatprep.subr.mxu0 0.0
    %117 = vmatpush1.xpose.msra.mxu0 %v81
    %118 = vmatprep.subr.mxu0 0.0
    %119 = vmatpush1.xpose.msra.mxu0 %v84
    %120 = vmatprep.subr.mxu0 0.0
    %121 = vmatpush1.xpose.msra.mxu0 %v87
    %122 = vmatprep.subr.mxu0 0.0
    %123 = vmatpush1.xpose.msra.mxu0 %v90
    %124 = vmatprep.subr.mxu0 0.0
    %125 = vmatpush1.xpose.msra.mxu0 0.0
    %126 = vmatprep.subr.mxu0 0.0
    %127 = vmatpush1.xpose.msra.mxu0 0.0
    %128 = vmatprep.subr.mxu0 0.0
    %129 = vmatpush1.xpose.msra.mxu0 0.0
    %130 = vmatprep.subr.mxu0 0.0
    %131 = vmatpush1.xpose.msra.mxu0 0.0
    %132 = vmatprep.subr.mxu0 0.0
    %133 = vmatpush1.xpose.msra.mxu0 0.0
    %134 = vmatprep.subr.mxu0 0.0
    %135 = vmatpush1.xpose.msra.mxu0 0.0
    %136 = vmatprep.subr.mxu0 0.0
    %137 = vmatpush1.xpose.msra.mxu0 0.0
    %138 = vmatprep.subr.mxu0 0.0
    %139 = vmatpush1.xpose.msra.mxu0 0.0
    %140 = vmatprep.subr.mxu0 0.0
    %141 = vmatpush1.xpose.msra.mxu0 0.0
    %142 = vmatprep.subr.mxu0 0.0
    %143 = vmatpush1.xpose.msra.mxu0 0.0
    %144 = vmatprep.subr.mxu0 0.0
    %145 = vmatpush1.xpose.msra.mxu0 0.0
    %146 = vmatprep.subr.mxu0 0.0
    %147 = vmatpush1.xpose.msra.mxu0 0.0
    %148 = vmatprep.subr.mxu0 0.0
    %149 = vmatpush1.xpose.msra.mxu0 0.0
    %150 = vmatprep.subr.mxu0 0.0
    %151 = vmatpush1.xpose.msra.mxu0 0.0
    %152 = vmatprep.subr.mxu0 0.0
    %153 = vmatpush1.xpose.msra.mxu0 0.0
    %154 = vmatprep.subr.mxu0 0.0
    %155 = vmatpush1.xpose.msra.mxu0 0.0
    %156 = vmatprep.mubr.f32.mxu0 0.0
    %157 = vmatmul.mubr.f32.gmra.mrb[0].mxu0 %v42
    %v158 = vpop.f32.mrb[0].mxu0
    %v159 = vadd.f32 0.0, %v158
    %v160 = vpop.f32.mrb[0].mxu0
    %161 = vdwg.mxu0
    %v162 = vld [vmem:[%s2] sm:$0xff]
    %v163 = vld [vmem:[%s3] sm:$0x1]
    %v164 = vmul.f32 %v159, 2.0
    %v165 = vsub.f32 2.000002, %v164
    %v166 = vmax.f32 %v165, 0.0
    %v167 = vrsqrt.pop %v166
    %v168 = vmul.f32 %v166, %v167
    %vm169 = vcmp.eq.f32.partialorder %v166, inf
    %v170 = vsel %vm169, %v166, %v168
    %vm171 = vcmp.eq.f32.partialorder %v166, 0.0
    %v172 = vand.u32 %v166, 2147483648
    %v173 = vsel %vm171, %v172, %v170
    %174 = vset.pattern.permute.xlu0 0
    %175 = vperm.xlu0 %174, %v162
    %v176 = vpop.permute.xlu0 %175
    %v177 = vlaneseq
    %v178 = vshrl.u32 %v177, 7
    %v179 = vsub.s32 0, %v178
    %v180 = vrot.slane %v163, %v179
    %vm181 = vcmp.eq.s32.totalorder %v176, %v180
    %v182 = vld [vmem:[#allocation2] sm:$0xff]
    %v183 = vsel %vm181, %v173, 0.0
    %v184 = vadd.f32 %v182, %v183
    %185 = vst [vmem:[#allocation2] sm:$0xff] %v184
    // Predicated region
    $region22: #{tpu_custom_call.1} parent=1 // pred_check
      _
    $region23: #{tpu_custom_call.1} parent=1 // pred_check_branch
      %187 = sbr.rel (0) target = $region25
    $region24: #{tpu_custom_call.1} parent=1 // pred_region
      %s189 = ssub.s32 128, 128
      %190 = vsyncadd [#allocation3], %s189
      %s192 = sshll.u32 [#allocation2], 4
      %s193 = int_to_ptr.vmem [resolvable:$true] %s192
      %195 = dma.vmem_to_hbm [thread:$0]  %s193, 128, %s4, [#allocation3]
    $region25: #{tpu_custom_call.1} parent=1 // pred_fallthru
      _
    // Predicated region
    $region26: #{tpu_custom_call.1} parent=1 // pred_check
      _
    $region27: #{tpu_custom_call.1} parent=1 // pred_check_branch
      %197 = sbr.rel (0) target = $region29
    $region28: #{tpu_custom_call.1} parent=1 // pred_region
      %198 = dma.done [#allocation3], 128
    $region29: #{tpu_custom_call.1} parent=1 // pred_fallthru
      _
    %199 = vsyncpa [#allocation3], 1

</llo_original>
